<compile_context>
chip_gen: v7x
topology: tpu7x:2x2x1
jax: 0.10.0
libtpu: 0.0.40
codegen_flags: <defaults>
</compile_context>

<pallas_src>
import jax
import jax.numpy as jnp
from jax.experimental import pallas as pl
from jax.experimental.pallas import tpu as pltpu

_LANE = 128
_SUBLANE_PACK = {4: 8, 2: 16, 1: 32}  # rows per (8,128) tile by itemsize


def _tanh_kernel(x_ref, o_ref):
    x = x_ref[...]
    if x.dtype != jnp.float32:
        # Fuse int promotion / bf16 widening into the (HBM-bound) kernel so the
        # EUP transcendental always runs in f32; cast once on store. Keeps v5e
        # (no native bf16 VPU/EUP) from decomposing tanh into VALU filler.
        x = x.astype(jnp.float32)
    o_ref[...] = jnp.tanh(x).astype(o_ref.dtype)


def _tpu_tuning():
    """Return (target_block_bytes, vmem_limit_bytes) for this TPU generation."""
    try:
        kind = jax.devices()[0].device_kind.lower()
    except Exception:
        kind = ""
    if "v5" in kind:
        # v5e default scoped VMEM is 16 MiB: 2 bufs x (in+out) x 3 MiB = 12 MiB
        # plus internal scratch fits; raise the limit anyway for headroom.
        return 3 * 1024 * 1024, 32 << 20
    if "v7" in kind or "7x" in kind:
        # v7x: ~3.2 TB/s per TC -> bigger blocks amortize ~0.35us/step overhead.
        # 2 x (in+out) x 8 MiB = 32 MiB, well under 64 MiB physical VMEM/TC.
        return 8 * 1024 * 1024, 48 << 20
    # v6e (and unknown): measured roofline plateaus (~86%) by ~4 MiB blocks.
    return 4 * 1024 * 1024, 48 << 20


def _sublane_pack(in_dtype, out_dtype):
    in_item = jnp.dtype(in_dtype).itemsize
    out_item = jnp.dtype(out_dtype).itemsize
    return max(_SUBLANE_PACK.get(in_item, 8), _SUBLANE_PACK.get(out_item, 8))


def _pick_width(n, sublane):
    # Prefer widths that also make `rows` a multiple of the sublane pack.
    for w in (1024, 512, 256, 128):
        if n % (w * sublane) == 0:
            return w
    for w in (1024, 512, 256, 128):
        if n % w == 0:
            return w
    return None


def _tanh_2d(x2d, out_dtype):
    """Run the tanh kernel over a lane-dense (rows, width) slab."""
    rows, width = x2d.shape
    in_item = jnp.dtype(x2d.dtype).itemsize
    out_item = jnp.dtype(out_dtype).itemsize
    sublane = _sublane_pack(x2d.dtype, out_dtype)
    target_bytes, vmem_limit = _tpu_tuning()

    if rows <= sublane:
        block_rows = rows  # single whole-array block (block == full dims)
    else:
        bytes_per_row = width * max(in_item, out_item)
        block_rows = max(sublane, target_bytes // bytes_per_row)
        block_rows -= block_rows % sublane
        # Ensure the grid has >= 2 programs so ("parallel",) can shard the
        # stream across v7x's two TensorCores (harmless on v5e/v6e).
        half = -(-rows // 2)
        half += (-half) % sublane
        block_rows = max(sublane, min(block_rows, half))

    grid = (pl.cdiv(rows, block_rows),)  # ragged last block masked by Pallas

    return pl.pallas_call(
        _tanh_kernel,
        out_shape=jax.ShapeDtypeStruct((rows, width), out_dtype),
        grid_spec=pltpu.PrefetchScalarGridSpec(
            num_scalar_prefetch=0,
            grid=grid,
            in_specs=[pl.BlockSpec((block_rows, width), lambda i: (i, 0))],
            out_specs=pl.BlockSpec((block_rows, width), lambda i: (i, 0)),
        ),
        compiler_params=pltpu.CompilerParams(
            dimension_semantics=("parallel",),
            vmem_limit_bytes=vmem_limit,
        ),
    )(x2d)


def pallas_tanh(x: jax.Array) -> jax.Array:
    """Apply tanh elementwise via a Pallas TPU kernel. Preserves shape.

    Integer inputs produce float32 output (promotion fused into the kernel);
    floating inputs keep their dtype.
    """
    orig_shape = x.shape
    in_dtype = x.dtype
    out_dtype = in_dtype if jnp.issubdtype(in_dtype, jnp.floating) else jnp.float32

    n = x.size
    if n == 0:
        return jnp.zeros(orig_shape, out_dtype)

    if jnp.dtype(in_dtype).itemsize >= 8:
        # TODO(synk): 64-bit dtypes have no sensible TPU vreg packing; use XLA.
        return jnp.tanh(x)

    sublane = _sublane_pack(in_dtype, out_dtype)

    width = _pick_width(n, sublane)
    if width is not None:
        out2d = _tanh_2d(x.reshape(n // width, width), out_dtype)
        return out2d.reshape(orig_shape)

    # Unaligned element count: stream the 128-aligned prefix through the main
    # kernel and pad ONLY the final partial tile (< 128 elems) to one vreg
    # tile, instead of pad+slice copies of the whole array.
    # TODO(synk): an in-kernel masked tail store would also drop the concat.
    flat = x.reshape(-1)
    rem = n % _LANE
    main_n = n - rem
    pieces = []
    if main_n:
        w = _pick_width(main_n, sublane)
        main2d = flat[:main_n].reshape(main_n // w, w)
        pieces.append(_tanh_2d(main2d, out_dtype).reshape(-1))
    tail = jnp.pad(flat[main_n:], (0, sublane * _LANE - rem))
    tail2d = tail.reshape(sublane, _LANE)
    pieces.append(_tanh_2d(tail2d, out_dtype).reshape(-1)[:rem])
    out_flat = pieces[0] if len(pieces) == 1 else jnp.concatenate(pieces)
    return out_flat.reshape(orig_shape)


if __name__ == "__main__":
    key = jax.random.PRNGKey(0)

    # Primary case: small NCHW activation, lane-aligned (2048 elems -> (8,256)).
    x = jax.random.normal(key, (2, 4, 16, 16), dtype=jnp.float32)
    y = pallas_tanh(x)
    jax.block_until_ready(y)
    y_ref = jnp.tanh(x)
    assert y.shape == x.shape and y.dtype == x.dtype
    assert jnp.allclose(y, y_ref, atol=1e-5, rtol=1e-5)

    # Unaligned element count exercises the tail-tile path.
    x_odd = jax.random.normal(jax.random.PRNGKey(1), (3, 5, 7), dtype=jnp.float32)
    y_odd = pallas_tanh(x_odd)
    jax.block_until_ready(y_odd)
    assert y_odd.shape == x_odd.shape and y_odd.dtype == x_odd.dtype
    assert jnp.allclose(y_odd, jnp.tanh(x_odd), atol=1e-5, rtol=1e-5)

    # Integer input: promotion to float32 fused inside the kernel.
    x_int = jax.random.randint(jax.random.PRNGKey(2), (4, 8, 16), -3, 4, dtype=jnp.int32)
    y_int = pallas_tanh(x_int)
    jax.block_until_ready(y_int)
    assert y_int.dtype == jnp.float32
    assert jnp.allclose(y_int, jnp.tanh(x_int.astype(jnp.float32)), atol=1e-5, rtol=1e-5)

    print("KERNEL_OK")
</pallas_src>

<mosaic_0001>
module attributes {stable_mosaic.version = 11 : i64} {
  func.func @_tanh_kernel(%arg0: i32, %arg1: memref<8x256xf32, #tpu.memory_space<vmem>>, %arg2: memref<8x256xf32, #tpu.memory_space<vmem>>) attributes {dimension_semantics = [#tpu.dimension_semantics<parallel>], iteration_bounds = array<i64: 1>, scalar_prefetch = 0 : i64, scratch_operands = 0 : i64, tpu.core_type = #tpu.core_type<tc>, window_params = [{transform_indices = @transform_0, window_bounds = array<i64: 8, 256>}, {transform_indices = @transform_1, window_bounds = array<i64: 8, 256>}]} {
    %c0 = arith.constant 0 : index
    %c0_0 = arith.constant 0 : index
    %0 = vector.load %arg1[%c0, %c0_0] : memref<8x256xf32, #tpu.memory_space<vmem>>, vector<8x256xf32>
    %1 = math.tanh %0 : vector<8x256xf32>
    %c0_1 = arith.constant 0 : index
    %c0_2 = arith.constant 0 : index
    %2 = vector.load %arg2[%c0_1, %c0_2] : memref<8x256xf32, #tpu.memory_space<vmem>>, vector<8x256xf32>
    tpu.vector_store %arg2[%c0_1, %c0_2], %1 {strides = array<i32>} : memref<8x256xf32, #tpu.memory_space<vmem>>, vector<8x256xf32>,
    return
  }
  func.func @transform_0(%arg0: i32) -> (i32, i32) {
    %c0_i32 = arith.constant 0 : i32
    %c0_i32_0 = arith.constant 0 : i32
    return %arg0, %c0_i32 : i32, i32
  }
  func.func @transform_1(%arg0: i32) -> (i32, i32) {
    %c0_i32 = arith.constant 0 : i32
    %c0_i32_0 = arith.constant 0 : i32
    return %arg0, %c0_i32 : i32, i32
  }
}

</mosaic_0001>

<llo_original>
// kernel: tpu_custom_call.1
$region0: #{tpu_custom_call.1}
  #allocation0 [shape = 'u32[]', space=smem, size = 0x4, offset = 0x4, fixed_abs, tag = 'smem constant byte address 0x4 - core index']
  #allocation1 [shape = 'u32[144,128]{1,0:T(1,128)}', space=vmem, size = 0x12000, scoped, tag = 'internal scratch']
  %s0 = inlined_call_operand.hbm [shape: f32[8,256], index: 0, kind: input, shape index: {}]
  %s1 = inlined_call_operand.hbm [shape: f32[8,256], index: 1, kind: output, shape index: {}]
  %s2 = sld [smem:[#allocation0]]
  $region18: #{tpu_custom_call.1} parent=0
    _
  %s4 = ssub.s32 1, %s2
  %s5 = scalar_select 0, %s4, %s2
  $region1: #{tpu_custom_call.1} parent=0
    #allocation2 [shape = 'u8[8192]{0}', space=vmem, size = 0x2000, scoped, tag = 'input window, operand 0, single buffered']
    #allocation3 [shape = 's32[1]{0}', space=sflag, size = 0x4, scoped, tag = 'scoped memory for tpu_custom_call.1']
    #allocation4 [shape = 's32[1]{0}', space=sflag, size = 0x4, scoped, tag = 'scoped memory for tpu_custom_call.1']
    #allocation5 [shape = 'u8[8192]{0}', space=vmem, size = 0x2000, scoped, tag = 'output window, operand 0, single buffered']
    %6 = vsyncpa [#allocation3], 0
    %7 = vsyncpa [#allocation4], 0
    // Predicated region
    $region2: #{tpu_custom_call.1} parent=1 // pred_check
      _
    $region3: #{tpu_custom_call.1} parent=1 // pred_check_branch
      %9 = sbr.rel (0) target = $region5
    $region4: #{tpu_custom_call.1} parent=1 // pred_region
      %s11 = ssub.s32 256, 256
      %12 = vsyncadd [#allocation3], %s11
      %s14 = sshll.u32 [#allocation2], 4
      %s15 = int_to_ptr.vmem [resolvable:$true] %s14
      %17 = dma.hbm_to_vmem [thread:$0]  %s0, 256, %s15, [#allocation3]
    $region5: #{tpu_custom_call.1} parent=1 // pred_fallthru
      _
    // Predicated region
    $region6: #{tpu_custom_call.1} parent=1 // pred_check
      _
    $region7: #{tpu_custom_call.1} parent=1 // pred_check_branch
      %19 = sbr.rel (0) target = $region9
    $region8: #{tpu_custom_call.1} parent=1 // pred_region
      %20 = dma.done [#allocation3], 256
    $region9: #{tpu_custom_call.1} parent=1 // pred_fallthru
      _
    %v21 = vld [vmem:[#allocation2] sm:$0xff]
    %v22 = vld [vmem:[#allocation2 + $0x8] sm:$0xff]
    %v23 = vtanh.pop %v21
    %v24 = vtanh.pop %v22
    %25 = vst [vmem:[#allocation5] sm:$0xff] %v23
    %26 = vst [vmem:[#allocation5 + $0x8] sm:$0xff] %v24
    // Predicated region
    $region10: #{tpu_custom_call.1} parent=1 // pred_check
      _
    $region11: #{tpu_custom_call.1} parent=1 // pred_check_branch
      %28 = sbr.rel (0) target = $region13
    $region12: #{tpu_custom_call.1} parent=1 // pred_region
      %s30 = ssub.s32 256, 256
      %31 = vsyncadd [#allocation4], %s30
      %s33 = sshll.u32 [#allocation5], 4
      %s34 = int_to_ptr.vmem [resolvable:$true] %s33
      %36 = dma.vmem_to_hbm [thread:$0]  %s34, 256, %s1, [#allocation4]
    $region13: #{tpu_custom_call.1} parent=1 // pred_fallthru
      _
    // Predicated region
    $region14: #{tpu_custom_call.1} parent=1 // pred_check
      _
    $region15: #{tpu_custom_call.1} parent=1 // pred_check_branch
      %38 = sbr.rel (0) target = $region17
    $region16: #{tpu_custom_call.1} parent=1 // pred_region
      %39 = dma.done [#allocation4], 256
    $region17: #{tpu_custom_call.1} parent=1 // pred_fallthru
      _
    %40 = vsyncpa [#allocation3], 1
    %41 = vsyncpa [#allocation4], 1

</llo_original>
